<compile_context>
chip_gen: v5e
topology: v5e:2x2
jax: 0.10.0
libtpu: 0.0.40
codegen_flags: <defaults>
</compile_context>

<pallas_src>
import functools
import math

import jax
import jax.numpy as jnp
from jax import lax
from jax.experimental import pallas as pl
from jax.experimental.pallas import tpu as pltpu


def _attention_kernel(x_ref, wqkv_ref, bqkv_ref, out_ref, attn_ref,
                      q_scr, k_scr, v_scr, acc_scr, *, tile_k, matmul_dtype):
    kidx = pl.program_id(1)
    c = out_ref.shape[1]

    # ---- Per-batch prologue (k == 0): fused QKV projection into persistent scratch. ----
    @pl.when(kidx == 0)
    def _project():
        x = x_ref[0]                                             # (C, L)
        w = wqkv_ref[...]                                        # (C, 3C); Wq pre-scaled
        if matmul_dtype is not None:
            x = x.astype(matmul_dtype)
        # qkv[l, o] = sum_c x[c, l] * Wqkv_T[c, o]  -> (L, 3C), f32 accumulation on MXU.
        qkv = lax.dot_general(x, w, (((0,), (0,)), ((), ())),
                              preferred_element_type=jnp.float32)
        qkv = qkv + bqkv_ref[...]                                # bias add in f32
        q_scr[...] = qkv[:, :c].astype(q_scr.dtype)              # (L, C)
        k_scr[...] = qkv[:, c:2 * c].astype(k_scr.dtype)         # (L, C)
        v_scr[...] = qkv[:, 2 * c:].astype(v_scr.dtype)          # (L, C)  (Lk, C) layout
        acc_scr[...] = jnp.zeros_like(acc_scr)

    # ---- One (L, tk) column tile of scores / softmax / attention weights. ----
    k0 = pl.multiple_of(kidx * tile_k, tile_k)
    q = q_scr[...]                                               # (L, C)
    k_t = k_scr[pl.ds(k0, tile_k), :]                            # (tk, C)
    scores = lax.dot_general(q, k_t, (((1,), (1,)), ((), ())),
                             preferred_element_type=jnp.float32)  # (L, tk)

    l = scores.shape[0]
    q_idx = lax.broadcasted_iota(jnp.int32, (l, tile_k), 0)
    k_idx = lax.broadcasted_iota(jnp.int32, (l, tile_k), 1) + kidx * tile_k
    scores = jnp.where(k_idx > q_idx, -jnp.inf, scores)          # causal: mask k > q
    # TODO(synk): also tile the query axis (3-D grid) to skip the fully-masked causal
    # region (~2x fewer MACs/exps) and to bound VMEM for very long L on v7x.

    # Softmax over the *query* axis (axis 0) — matches torch softmax(dim=1).
    m = jnp.max(scores, axis=0, keepdims=True)                   # (1, tk)
    e = jnp.exp(scores - m)                                      # (L, tk)
    denom = jnp.sum(e, axis=0, keepdims=True)                    # (1, tk)
    attn = e * pl.reciprocal(denom, approx=False)                # L recips + cheap muls
    attn_ref[0] = attn.astype(attn_ref.dtype)

    # ---- Accumulate output in (Lq, C): attn is the canonical (non-transposed) LHS and
    #      V is already in (Lk, C), so no O(L^2) transposes are generated. ----
    v_t = v_scr[pl.ds(k0, tile_k), :]                            # (tk, C)
    attn_mm = attn.astype(v_t.dtype)
    acc_scr[...] += lax.dot_general(attn_mm, v_t, (((1,), (0,)), ((), ())),
                                    preferred_element_type=jnp.float32)   # (L, C)

    # ---- Per-batch epilogue (k == last): single O(C*L) transpose to (C, L) layout. ----
    @pl.when(kidx == pl.num_programs(1) - 1)
    def _finalize():
        out_ref[0] = jnp.transpose(acc_scr[...], (1, 0)).astype(out_ref.dtype)


def _vmem_bytes_estimate(c, l, tile_k, x_bytes, scr_bytes, attn_bytes):
    """Rough per-core VMEM budget: double-buffered blocks + scratch + f32 tile temps."""
    blocks = 2 * c * l * x_bytes              # x block (resident per batch, 2 buffers)
    blocks += 2 * c * l * x_bytes             # out block
    blocks += 2 * l * tile_k * attn_bytes     # attn column-tile block
    blocks += 2 * (3 * c * c + 3 * c) * 4     # stacked weights + bias (generous)
    scratch = 3 * l * c * scr_bytes + l * c * 4
    temps = 4 * l * tile_k * 4                # scores / mask / exp temporaries (f32)
    return blocks + scratch + temps


def _pick_tile_k(c, l, x_bytes, scr_bytes, attn_bytes, budget=40 * 2**20):
    # tk must be a multiple of 128 (lane-dense attn stores) or the full L.
    if l % 128 != 0:
        # TODO(synk): pad L to a multiple of 128 / batch-pack tiny problems for lane-dense
        # stores; needs careful -inf handling for padded queries under query-axis softmax.
        return l
    for tk in (512, 256, 128):
        if l % tk == 0 and _vmem_bytes_estimate(c, l, tk, x_bytes, scr_bytes,
                                                attn_bytes) <= budget:
            return tk
    return 128


def attention_block(x, wq, bq, wk, bk, wv, bv, *, tile_k=None,
                    matmul_dtype=None, attn_dtype=jnp.float32):
    """x: (N, C, L); w*: (C, C) in PyTorch (out, in) layout; b*: (C,).

    Returns (value_attentioned (N, C, L), weight_temp (N, L, L)).

    matmul_dtype: optionally cast MXU operands (e.g. jnp.bfloat16 on v6e/v7x);
                  softmax math stays f32.  Re-validate tolerances before using.
    attn_dtype:   dtype of the returned attention weights; f32 matches PyTorch, bf16
                  halves the dominant HBM writeback at large L.
    """
    n, c, l = x.shape
    scale = 1.0 / math.sqrt(c)

    # Fold the 1/sqrt(C) softmax scale into the query projection (zero kernel cost) and
    # stack Q/K/V into one (C_in, 3*C_out) weight for a single fused MXU pass.
    wqkv_t = jnp.concatenate([(wq * scale).T, wk.T, wv.T], axis=1)       # (C, 3C)
    bqkv = jnp.concatenate([bq * scale, bk, bv]).reshape(1, 3 * c)       # (1, 3C), f32
    if matmul_dtype is not None:
        wqkv_t = wqkv_t.astype(matmul_dtype)

    scr_dtype = matmul_dtype if matmul_dtype is not None else jnp.float32
    x_bytes = x.dtype.itemsize
    scr_bytes = jnp.dtype(scr_dtype).itemsize
    attn_bytes = jnp.dtype(attn_dtype).itemsize
    if tile_k is None:
        tile_k = _pick_tile_k(c, l, x_bytes, scr_bytes, attn_bytes)
    assert l % tile_k == 0 and (tile_k == l or tile_k % 128 == 0), (l, tile_k)
    n_k = l // tile_k

    vmem_limit = int(min(100 * 2**20,
                         max(32 * 2**20,
                             1.25 * _vmem_bytes_estimate(c, l, tile_k, x_bytes,
                                                         scr_bytes, attn_bytes))))

    kernel = functools.partial(_attention_kernel, tile_k=tile_k,
                               matmul_dtype=matmul_dtype)
    out, attn = pl.pallas_call(
        kernel,
        out_shape=(
            jax.ShapeDtypeStruct((n, c, l), x.dtype),
            jax.ShapeDtypeStruct((n, l, l), attn_dtype),
        ),
        grid_spec=pltpu.PrefetchScalarGridSpec(
            num_scalar_prefetch=0,
            grid=(n, n_k),
            in_specs=[
                pl.BlockSpec((1, c, l), lambda b, k: (b, 0, 0)),        # x (resident per batch)
                pl.BlockSpec((c, 3 * c), lambda b, k: (0, 0)),          # stacked Wqkv^T
                pl.BlockSpec((1, 3 * c), lambda b, k: (0, 0)),          # stacked bias
            ],
            out_specs=[
                pl.BlockSpec((1, c, l), lambda b, k: (b, 0, 0)),        # out (written at k==last)
                pl.BlockSpec((1, l, tile_k), lambda b, k: (b, 0, k)),   # attn column tile
            ],
            scratch_shapes=[
                pltpu.VMEM((l, c), scr_dtype),       # Q  (scale pre-folded)
                pltpu.VMEM((l, c), scr_dtype),       # K
                pltpu.VMEM((l, c), scr_dtype),       # V  in (Lk, C) layout
                pltpu.VMEM((l, c), jnp.float32),     # output accumulator (Lq, C)
            ],
        ),
        compiler_params=pltpu.CompilerParams(
            dimension_semantics=("parallel", "arbitrary"),
            vmem_limit_bytes=vmem_limit,
        ),
    )(x, wqkv_t, bqkv)
    return out, attn


def attention_block_ref(x, wq, bq, wk, bk, wv, bv):
    """Pure-JAX reference mirroring the PyTorch forward exactly."""
    n, c, l = x.shape
    hp = lax.Precision.HIGHEST
    xt = jnp.transpose(x, (0, 2, 1))                               # (N, L, C)
    q = jnp.einsum("nlc,dc->nld", xt, wq, precision=hp) + bq
    k = jnp.einsum("nlc,dc->nld", xt, wk, precision=hp) + bk
    v = jnp.einsum("nlc,dc->nld", xt, wv, precision=hp) + bv
    temp = jnp.einsum("nqc,nkc->nqk", q, k, precision=hp)
    mask = jnp.arange(l)[None, :] > jnp.arange(l)[:, None]         # [q, k]: k > q
    temp = jnp.where(mask[None, :, :], -jnp.inf, temp)
    attn = jax.nn.softmax(temp / math.sqrt(c), axis=1)             # softmax over q
    out = jnp.einsum("nqk,nkc->nqc", attn, v, precision=hp)
    return jnp.transpose(out, (0, 2, 1)), attn


if __name__ == "__main__":
    key = jax.random.PRNGKey(0)
    N, C, L = 2, 4, 16
    ks = jax.random.split(key, 7)
    x = jax.random.normal(ks[0], (N, C, L), dtype=jnp.float32)
    wq = jax.random.normal(ks[1], (C, C), dtype=jnp.float32) / math.sqrt(C)
    bq = jax.random.normal(ks[2], (C,), dtype=jnp.float32) * 0.1
    wk = jax.random.normal(ks[3], (C, C), dtype=jnp.float32) / math.sqrt(C)
    bk = jax.random.normal(ks[4], (C,), dtype=jnp.float32) * 0.1
    wv = jax.random.normal(ks[5], (C, C), dtype=jnp.float32) / math.sqrt(C)
    bv = jax.random.normal(ks[6], (C,), dtype=jnp.float32) * 0.1

    ref_out, ref_attn = attention_block_ref(x, wq, bq, wk, bk, wv, bv)

    # Default (f32) path: must match the HIGHEST-precision reference tightly.
    out, attn = attention_block(x, wq, bq, wk, bk, wv, bv)
    out, attn = jax.block_until_ready((out, attn))
    assert out.shape == (N, C, L), out.shape
    assert attn.shape == (N, L, L), attn.shape
    assert jnp.allclose(attn, ref_attn, atol=1e-4, rtol=1e-4), \
        float(jnp.max(jnp.abs(attn - ref_attn)))
    assert jnp.allclose(out, ref_out, atol=1e-4, rtol=1e-4), \
        float(jnp.max(jnp.abs(out - ref_out)))

    # bf16-MXU / bf16-attn-writeback fast path (v6e/v7x). Coarse sanity bounds only —
    # per the review, re-validate tolerances at production shapes before relying on it.
    out_bf, attn_bf = attention_block(x, wq, bq, wk, bk, wv, bv,
                                      matmul_dtype=jnp.bfloat16,
                                      attn_dtype=jnp.bfloat16)
    out_bf, attn_bf = jax.block_until_ready((out_bf, attn_bf))
    assert out_bf.shape == (N, C, L) and attn_bf.shape == (N, L, L)
    assert bool(jnp.all(jnp.isfinite(out_bf.astype(jnp.float32))))
    assert float(jnp.max(jnp.abs(attn_bf.astype(jnp.float32) - ref_attn))) < 1e-1
    assert float(jnp.max(jnp.abs(out_bf.astype(jnp.float32) - ref_out))) < 5e-1

    print("KERNEL_OK")
</pallas_src>

<mosaic_0001>
module attributes {stable_mosaic.version = 11 : i64} {
  func.func @_attention_kernel(%arg0: i32, %arg1: i32, %arg2: memref<1x4x16xf32, #tpu.memory_space<vmem>>, %arg3: memref<4x12xf32, #tpu.memory_space<vmem>>, %arg4: memref<1x12xf32, #tpu.memory_space<vmem>>, %arg5: memref<1x4x16xf32, #tpu.memory_space<vmem>>, %arg6: memref<1x16x16xf32, #tpu.memory_space<vmem>>, %arg7: memref<16x4xf32, #tpu.memory_space<vmem>>, %arg8: memref<16x4xf32, #tpu.memory_space<vmem>>, %arg9: memref<16x4xf32, #tpu.memory_space<vmem>>, %arg10: memref<16x4xf32, #tpu.memory_space<vmem>>) attributes {dimension_semantics = [#tpu.dimension_semantics<parallel>, #tpu.dimension_semantics<arbitrary>], iteration_bounds = array<i64: 2, 1>, scalar_prefetch = 0 : i64, scratch_operands = 4 : i64, tpu.core_type = #tpu.core_type<tc>, window_params = [{transform_indices = @transform_0, window_bounds = array<i64: 1, 4, 16>}, {pipeline_mode = #tpu.pipeline_mode<synchronous>, transform_indices = @transform_1, window_bounds = array<i64: 4, 12>}, {pipeline_mode = #tpu.pipeline_mode<synchronous>, transform_indices = @transform_2, window_bounds = array<i64: 1, 12>}, {transform_indices = @transform_3, window_bounds = array<i64: 1, 4, 16>}, {transform_indices = @transform_4, window_bounds = array<i64: 1, 16, 16>}]} {
    %c0_i32 = arith.constant 0 : i32
    %0 = arith.cmpi eq, %arg1, %c0_i32 : i32
    %1 = arith.extui %0 : i1 to i32
    %c0_i32_0 = arith.constant 0 : i32
    %2 = arith.cmpi ne, %1, %c0_i32_0 : i32
    scf.if %2 {
      %c0_18 = arith.constant 0 : index
      %c0_19 = arith.constant 0 : index
      %c0_20 = arith.constant 0 : index
      %39 = vector.load %arg2[%c0_18, %c0_19, %c0_20] : memref<1x4x16xf32, #tpu.memory_space<vmem>>, vector<1x4x16xf32>
      %40 = vector.shape_cast %39 : vector<1x4x16xf32> to vector<4x16xf32>
      %c0_21 = arith.constant 0 : index
      %c0_22 = arith.constant 0 : index
      %41 = vector.load %arg3[%c0_21, %c0_22] : memref<4x12xf32, #tpu.memory_space<vmem>>, vector<4x12xf32>
      %cst_23 = arith.constant dense<0.000000e+00> : vector<16x12xf32>
      %42 = tpu.matmul %40, %41, %cst_23 {dimension_numbers = #tpu.dot_dimension_numbers<[0], [0], [1], [1], [0, 1, 1, 1], [], []>} : vector<4x16xf32>, vector<4x12xf32>, vector<16x12xf32> -> vector<16x12xf32>
      %c0_24 = arith.constant 0 : index
      %c0_25 = arith.constant 0 : index
      %43 = vector.load %arg4[%c0_24, %c0_25] : memref<1x12xf32, #tpu.memory_space<vmem>>, vector<1x12xf32>
      %44 = vector.broadcast %43 : vector<1x12xf32> to vector<16x12xf32>
      %45 = arith.addf %42, %44 : vector<16x12xf32>
      %46 = vector.extract_strided_slice %45 {offsets = [0, 0], sizes = [16, 4], strides = [1, 1]} : vector<16x12xf32> to vector<16x4xf32>
      %c0_26 = arith.constant 0 : index
      %c0_27 = arith.constant 0 : index
      %47 = vector.load %arg7[%c0_26, %c0_27] : memref<16x4xf32, #tpu.memory_space<vmem>>, vector<16x4xf32>
      tpu.vector_store %arg7[%c0_26, %c0_27], %46 {strides = array<i32>} : memref<16x4xf32, #tpu.memory_space<vmem>>, vector<16x4xf32>,
      %48 = vector.extract_strided_slice %45 {offsets = [0, 4], sizes = [16, 4], strides = [1, 1]} : vector<16x12xf32> to vector<16x4xf32>
      %c0_28 = arith.constant 0 : index
      %c0_29 = arith.constant 0 : index
      %49 = vector.load %arg8[%c0_28, %c0_29] : memref<16x4xf32, #tpu.memory_space<vmem>>, vector<16x4xf32>
      tpu.vector_store %arg8[%c0_28, %c0_29], %48 {strides = array<i32>} : memref<16x4xf32, #tpu.memory_space<vmem>>, vector<16x4xf32>,
      %50 = vector.extract_strided_slice %45 {offsets = [0, 8], sizes = [16, 4], strides = [1, 1]} : vector<16x12xf32> to vector<16x4xf32>
      %c0_30 = arith.constant 0 : index
      %c0_31 = arith.constant 0 : index
      %51 = vector.load %arg9[%c0_30, %c0_31] : memref<16x4xf32, #tpu.memory_space<vmem>>, vector<16x4xf32>
      tpu.vector_store %arg9[%c0_30, %c0_31], %50 {strides = array<i32>} : memref<16x4xf32, #tpu.memory_space<vmem>>, vector<16x4xf32>,
      %cst_32 = arith.constant 0.000000e+00 : f32
      %52 = vector.broadcast %cst_32 : f32 to vector<16x4xf32>
      %c0_33 = arith.constant 0 : index
      %c0_34 = arith.constant 0 : index
      %53 = vector.load %arg10[%c0_33, %c0_34] : memref<16x4xf32, #tpu.memory_space<vmem>>, vector<16x4xf32>
      tpu.vector_store %arg10[%c0_33, %c0_34], %52 {strides = array<i32>} : memref<16x4xf32, #tpu.memory_space<vmem>>, vector<16x4xf32>,
    } else {
    }
    %c16_i32 = arith.constant 16 : i32
    %3 = arith.muli %arg1, %c16_i32 : i32
    %4 = tpu.assume_multiple %3, 16 : i32
    %c0 = arith.constant 0 : index
    %c0_1 = arith.constant 0 : index
    %5 = vector.load %arg7[%c0, %c0_1] : memref<16x4xf32, #tpu.memory_space<vmem>>, vector<16x4xf32>
    %6 = arith.index_cast %4 : i32 to index
    %c0_2 = arith.constant 0 : index
    %7 = vector.load %arg8[%6, %c0_2] : memref<16x4xf32, #tpu.memory_space<vmem>>, vector<16x4xf32>
    %cst = arith.constant dense<0.000000e+00> : vector<16x16xf32>
    %8 = tpu.matmul %5, %7, %cst {dimension_numbers = #tpu.dot_dimension_numbers<[1], [1], [0], [0], [0, 0, 1, 0], [], []>} : vector<16x4xf32>, vector<16x4xf32>, vector<16x16xf32> -> vector<16x16xf32>
    %9 = tpu.iota {dimensions = array<i32: 0>} : vector<16x16xi32>
    %10 = tpu.iota {dimensions = array<i32: 1>} : vector<16x16xi32>
    %c16_i32_3 = arith.constant 16 : i32
    %11 = arith.muli %arg1, %c16_i32_3 : i32
    %12 = vector.broadcast %11 : i32 to vector<16x16xi32>
    %13 = arith.addi %10, %12 : vector<16x16xi32>
    %14 = arith.cmpi sgt, %13, %9 : vector<16x16xi32>
    %cst_4 = arith.constant 0xFF800000 : f32
    %15 = vector.broadcast %cst_4 : f32 to vector<16x16xf32>
    %16 = arith.select %14, %15, %8 : vector<16x16xi1>, vector<16x16xf32>
    %cst_5 = arith.constant dense<0xFF800000> : vector<16xf32>
    %17 = vector.multi_reduction <maximumf>, %16, %cst_5 [0] : vector<16x16xf32> to vector<16xf32>
    %18 = vector.shape_cast %17 : vector<16xf32> to vector<1x16xf32>
    %19 = vector.broadcast %18 : vector<1x16xf32> to vector<16x16xf32>
    %20 = arith.subf %16, %19 : vector<16x16xf32>
    %21 = math.exp %20 : vector<16x16xf32>
    %cst_6 = arith.constant dense<0.000000e+00> : vector<16xf32>
    %22 = vector.multi_reduction <add>, %21, %cst_6 [0] : vector<16x16xf32> to vector<16xf32>
    %23 = vector.shape_cast %22 : vector<16xf32> to vector<1x16xf32>
    %24 = tpu.reciprocal %23 : vector<1x16xf32> -> vector<1x16xf32>
    %25 = vector.broadcast %24 : vector<1x16xf32> to vector<16x16xf32>
    %26 = arith.mulf %21, %25 : vector<16x16xf32>
    %c0_7 = arith.constant 0 : index
    %c0_8 = arith.constant 0 : index
    %c0_9 = arith.constant 0 : index
    %27 = vector.load %arg6[%c0_7, %c0_8, %c0_9] : memref<1x16x16xf32, #tpu.memory_space<vmem>>, vector<1x16x16xf32>
    %28 = vector.shape_cast %27 : vector<1x16x16xf32> to vector<16x16xf32>
    %29 = vector.shape_cast %26 : vector<16x16xf32> to vector<1x16x16xf32>
    tpu.vector_store %arg6[%c0_7, %c0_8, %c0_9], %29 {strides = array<i32>} : memref<1x16x16xf32, #tpu.memory_space<vmem>>, vector<1x16x16xf32>,
    %30 = arith.index_cast %4 : i32 to index
    %c0_10 = arith.constant 0 : index
    %31 = vector.load %arg9[%30, %c0_10] : memref<16x4xf32, #tpu.memory_space<vmem>>, vector<16x4xf32>
    %c0_11 = arith.constant 0 : index
    %c0_12 = arith.constant 0 : index
    %32 = vector.load %arg10[%c0_11, %c0_12] : memref<16x4xf32, #tpu.memory_space<vmem>>, vector<16x4xf32>
    %cst_13 = arith.constant dense<0.000000e+00> : vector<16x4xf32>
    %33 = tpu.matmul %26, %31, %cst_13 {dimension_numbers = #tpu.dot_dimension_numbers<[1], [0], [0], [1], [0, 0, 1, 1], [], []>} : vector<16x16xf32>, vector<16x4xf32>, vector<16x4xf32> -> vector<16x4xf32>
    %34 = arith.addf %32, %33 : vector<16x4xf32>
    %c0_14 = arith.constant 0 : index
    %c0_15 = arith.constant 0 : index
    %35 = vector.load %arg10[%c0_14, %c0_15] : memref<16x4xf32, #tpu.memory_space<vmem>>, vector<16x4xf32>
    tpu.vector_store %arg10[%c0_14, %c0_15], %34 {strides = array<i32>} : memref<16x4xf32, #tpu.memory_space<vmem>>, vector<16x4xf32>,
    %c0_i32_16 = arith.constant 0 : i32
    %36 = arith.cmpi eq, %arg1, %c0_i32_16 : i32
    %37 = arith.extui %36 : i1 to i32
    %c0_i32_17 = arith.constant 0 : i32
    %38 = arith.cmpi ne, %37, %c0_i32_17 : i32
    scf.if %38 {
      %c0_18 = arith.constant 0 : index
      %c0_19 = arith.constant 0 : index
      %39 = vector.load %arg10[%c0_18, %c0_19] : memref<16x4xf32, #tpu.memory_space<vmem>>, vector<16x4xf32>
      %40 = tpu.transpose %39, [1, 0] : vector<16x4xf32> -> vector<4x16xf32>
      %c0_20 = arith.constant 0 : index
      %c0_21 = arith.constant 0 : index
      %c0_22 = arith.constant 0 : index
      %41 = vector.load %arg5[%c0_20, %c0_21, %c0_22] : memref<1x4x16xf32, #tpu.memory_space<vmem>>, vector<1x4x16xf32>
      %42 = vector.shape_cast %41 : vector<1x4x16xf32> to vector<4x16xf32>
      %43 = vector.shape_cast %40 : vector<4x16xf32> to vector<1x4x16xf32>
      tpu.vector_store %arg5[%c0_20, %c0_21, %c0_22], %43 {strides = array<i32>} : memref<1x4x16xf32, #tpu.memory_space<vmem>>, vector<1x4x16xf32>,
    } else {
    }
    return
  }
  func.func @transform_0(%arg0: i32, %arg1: i32) -> (i32, i32, i32) {
    %c0_i32 = arith.constant 0 : i32
    %c0_i32_0 = arith.constant 0 : i32
    %c0_i32_1 = arith.constant 0 : i32
    return %arg0, %c0_i32, %c0_i32_0 : i32, i32, i32
  }
  func.func @transform_1(%arg0: i32, %arg1: i32) -> (i32, i32) {
    %c0_i32 = arith.constant 0 : i32
    %c0_i32_0 = arith.constant 0 : i32
    %c0_i32_1 = arith.constant 0 : i32
    return %c0_i32, %c0_i32_0 : i32, i32
  }
  func.func @transform_2(%arg0: i32, %arg1: i32) -> (i32, i32) {
    %c0_i32 = arith.constant 0 : i32
    %c0_i32_0 = arith.constant 0 : i32
    %c0_i32_1 = arith.constant 0 : i32
    return %c0_i32, %c0_i32_0 : i32, i32
  }
  func.func @transform_3(%arg0: i32, %arg1: i32) -> (i32, i32, i32) {
    %c0_i32 = arith.constant 0 : i32
    %c0_i32_0 = arith.constant 0 : i32
    %c0_i32_1 = arith.constant 0 : i32
    return %arg0, %c0_i32, %c0_i32_0 : i32, i32, i32
  }
  func.func @transform_4(%arg0: i32, %arg1: i32) -> (i32, i32, i32) {
    %c0_i32 = arith.constant 0 : i32
    %c0_i32_0 = arith.constant 0 : i32
    return %arg0, %c0_i32, %arg1 : i32, i32, i32
  }
}

</mosaic_0001>

<llo_original>
// kernel: tpu_custom_call.1
$region0: #{tpu_custom_call.1}
  #allocation0 [shape = 'u32[]', space=smem, size = 0x4, offset = 0x4, fixed_abs, tag = 'smem constant byte address 0x4 - core index']
  #allocation1 [shape = 'u32[72,128]{1,0:T(1,128)}', space=vmem, size = 0x9000, scoped, tag = 'internal scratch']
  #allocation2 [shape = 'f32[16,4]{1,0:T(8,128)}', space=vmem, size = 0x2000, scoped, tag = 'scratch operand']
  #allocation3 [shape = 'f32[16,4]{1,0:T(8,128)}', space=vmem, size = 0x2000, scoped, tag = 'scratch operand']
  #allocation4 [shape = 'f32[16,4]{1,0:T(8,128)}', space=vmem, size = 0x2000, scoped, tag = 'scratch operand']
  #allocation5 [shape = 'f32[16,4]{1,0:T(8,128)}', space=vmem, size = 0x2000, scoped, tag = 'scratch operand']
  %s0 = inlined_call_operand.hbm [shape: f32[2,4,16], index: 0, kind: input, shape index: {}]
  %s1 = inlined_call_operand.hbm [shape: f32[4,12], index: 1, kind: input, shape index: {}]
  %s2 = inlined_call_operand.vmem [shape: f32[1,12], index: 2, kind: input, shape index: {}]
  %s3 = inlined_call_operand.hbm [shape: f32[2,4,16], index: 3, kind: output, shape index: {0}]
  %s4 = inlined_call_operand.hbm [shape: f32[2,16,16], index: 4, kind: output, shape index: {1}]
  %5 = xla_tuple %s3, %s4
  %s6 = sld [smem:[#allocation0]]
  $region69: #{tpu_custom_call.1} parent=0
    _
  %s8 = ssub.s32 1, %s6
  %s9 = scalar_select 0, %s8, %s6
  $region1: #{tpu_custom_call.1} parent=0
    #allocation6 [shape = 'u8[4096]{0}', space=vmem, size = 0x1000, scoped, tag = 'input window, operand 0']
    #allocation7 [shape = 's32[2]{0}', space=sflag, size = 0x8, scoped, tag = 'scoped memory for tpu_custom_call.1']
    #allocation8 [shape = 's32[2]{0}', space=sflag, size = 0x8, scoped, tag = 'scoped memory for tpu_custom_call.1']
    #allocation9 [shape = 'u8[2048]{0}', space=vmem, size = 0x800, scoped, tag = 'input window, operand 1, single buffered']
    #allocation10 [shape = 's32[1]{0}', space=sflag, size = 0x4, scoped, tag = 'scoped memory for tpu_custom_call.1']
    #allocation11 [shape = 'u8[4096]{0}', space=vmem, size = 0x1000, scoped, tag = 'output window, operand 0']
    #allocation12 [shape = 'u8[16384]{0}', space=vmem, size = 0x4000, scoped, tag = 'output window, operand 1']
    #allocation13 [shape = 's32[2]{0}', space=sflag, size = 0x8, scoped, tag = 'scoped memory for tpu_custom_call.1']
    %10 = vsyncpa [#allocation7], 0
    %s11 = scalar_lea.sflag [#allocation7], 1
    %12 = vsyncpa %s11, 0
    %13 = vsyncpa [#allocation10], 0
    %14 = vsyncpa [#allocation8], 0
    %s15 = scalar_lea.sflag [#allocation8], 1
    %16 = vsyncpa %s15, 0
    %17 = vsyncpa [#allocation13], 0
    %s18 = scalar_lea.sflag [#allocation13], 1
    %19 = vsyncpa %s18, 0
    loop: start=0, step=1, limit=4
    $region2: #{tpu_custom_call.1} parent=1 // loop_pre_header
      _
    $region3: #{tpu_custom_call.1} parent=1 // loop_header
      %s21 = sphi 0, %s25
      %p22 = scmp.ge.s32.totalorder %s21, 4
      %s28 = sphi 0, %s40
      %s29 = sphi 0, %s36
      %s30 = sphi 0, %s28
      %s31 = sphi 0, %s29
      %s32 = sphi 0, %s30
      %s33 = sphi 0, %s31
      %s43 = sphi 0, %s45
      %s46 = sphi 0, %s43
      %s47 = sphi 0, %s46
      %s63 = sphi 0, %s47
      %s67 = sphi 0, %s67
      %s69 = sphi 0, %s67
      %s70 = sphi 0, %s69
      %s84 = sphi 0, %s70
      %s88 = sphi 0, %s88
      %s90 = sphi 0, %s88
      %s91 = sphi 0, %s90
      %s105 = sphi 0, %s91
      %s111 = sphi 0, %s113
      %s114 = sphi 0, %s111
      %s115 = sphi 0, %s114
      %s131 = sphi 0, %s115
      %s139 = sphi 0, %s141
      %s142 = sphi 0, %s139
      %s143 = sphi 0, %s142
      %s159 = sphi 0, %s143
    $region4: #{tpu_custom_call.1} parent=1 // loop_header_branch
      %24 = sbr.rel (%p22) target = $region8
    $region5: #{tpu_custom_call.1} parent=1 // loop_body
      %s26 = ssub.s32 %s21, 1
      %s27 = ssub.s32 %s21, 2
      %s34 = sadd.s32 1, %s29
      %p35 = scmp.ge.s32.totalorder %s34, 1
      %s36 = scalar_select %p35, 0, %s34
      %s37 = sadd.s32 1, %s28
      %s38 = scalar_select %p35, %s37, %s28
      %p39 = scmp.ge.s32.totalorder %s38, 2
      %s40 = scalar_select %p39, 0, %s38
      %s41 = ssub.s32 %s28, %s40
      %p42 = scmp.eq.s32.totalorder %s41, 0
      %s44 = sadd.s32 %s43, 1
      %s45 = scalar_select %p42, %s43, %s44
      %p48 = pneg %p42
      %p49 = scmp.eq.s32.totalorder %s21, 1
      %p50 = por %p48, %p49
      %p51 = scmp.ne.s32.totalorder %s43, %s46
      %p52 = scmp.eq.s32.totalorder %s21, 0
      %p53 = por %p51, %p52
      %p54 = scmp.ne.s32.totalorder %s43, %s46
      %p55 = scmp.eq.s32.totalorder %s26, 1
      %p56 = por %p54, %p55
      %p57 = scmp.ne.s32.totalorder %s46, %s47
      %p58 = scmp.eq.s32.totalorder %s26, 0
      %p59 = por %p57, %p58
      %p60 = scmp.ne.s32.totalorder %s46, %s47
      %p61 = scmp.eq.s32.totalorder %s27, 1
      %p62 = por %p60, %p61
      %p64 = scmp.ne.s32.totalorder %s47, %s63
      %p65 = scmp.eq.s32.totalorder %s27, 0
      %p66 = por %p64, %p65
      %s68 = sadd.s32 %s67, 1
      %p71 = scmp.eq.s32.totalorder %s21, 1
      %p72 = scmp.ne.s32.totalorder %s67, %s69
      %p73 = scmp.eq.s32.totalorder %s21, 0
      %p74 = por %p72, %p73
      %p75 = scmp.ne.s32.totalorder %s67, %s69
      %p76 = scmp.eq.s32.totalorder %s26, 1
      %p77 = por %p75, %p76
      %p78 = scmp.ne.s32.totalorder %s69, %s70
      %p79 = scmp.eq.s32.totalorder %s26, 0
      %p80 = por %p78, %p79
      %p81 = scmp.ne.s32.totalorder %s69, %s70
      %p82 = scmp.eq.s32.totalorder %s27, 1
      %p83 = por %p81, %p82
      %p85 = scmp.ne.s32.totalorder %s70, %s84
      %p86 = scmp.eq.s32.totalorder %s27, 0
      %p87 = por %p85, %p86
      %s89 = sadd.s32 %s88, 1
      %p92 = scmp.eq.s32.totalorder %s21, 1
      %p93 = scmp.ne.s32.totalorder %s88, %s90
      %p94 = scmp.eq.s32.totalorder %s21, 0
      %p95 = por %p93, %p94
      %p96 = scmp.ne.s32.totalorder %s88, %s90
      %p97 = scmp.eq.s32.totalorder %s26, 1
      %p98 = por %p96, %p97
      %p99 = scmp.ne.s32.totalorder %s90, %s91
      %p100 = scmp.eq.s32.totalorder %s26, 0
      %p101 = por %p99, %p100
      %p102 = scmp.ne.s32.totalorder %s90, %s91
      %p103 = scmp.eq.s32.totalorder %s27, 1
      %p104 = por %p102, %p103
      %p106 = scmp.ne.s32.totalorder %s91, %s105
      %p107 = scmp.eq.s32.totalorder %s27, 0
      %p108 = por %p106, %p107
      %s109 = ssub.s32 %s28, %s40
      %p110 = scmp.eq.s32.totalorder %s109, 0
      %s112 = sadd.s32 %s111, 1
      %s113 = scalar_select %p110, %s111, %s112
      %p116 = pneg %p110
      %p117 = scmp.eq.s32.totalorder %s21, 1
      %p118 = por %p116, %p117
      %p119 = scmp.ne.s32.totalorder %s111, %s114
      %p120 = scmp.eq.s32.totalorder %s21, 0
      %p121 = por %p119, %p120
      %p122 = scmp.ne.s32.totalorder %s111, %s114
      %p123 = scmp.eq.s32.totalorder %s26, 1
      %p124 = por %p122, %p123
      %p125 = scmp.ne.s32.totalorder %s114, %s115
      %p126 = scmp.eq.s32.totalorder %s26, 0
      %p127 = por %p125, %p126
      %p128 = scmp.ne.s32.totalorder %s114, %s115
      %p129 = scmp.eq.s32.totalorder %s27, 1
      %p130 = por %p128, %p129
      %p132 = scmp.ne.s32.totalorder %s115, %s131
      %p133 = scmp.eq.s32.totalorder %s27, 0
      %p134 = por %p132, %p133
      %s135 = ssub.s32 %s28, %s40
      %s136 = ssub.s32 %s29, %s36
      %s137 = sor.u32 %s135, %s136
      %p138 = scmp.eq.s32.totalorder %s137, 0
      %s140 = sadd.s32 %s139, 1
      %s141 = scalar_select %p138, %s139, %s140
      %p144 = pneg %p138
      %p145 = scmp.eq.s32.totalorder %s21, 1
      %p146 = por %p144, %p145
      %p147 = scmp.ne.s32.totalorder %s139, %s142
      %p148 = scmp.eq.s32.totalorder %s21, 0
      %p149 = por %p147, %p148
      %p150 = scmp.ne.s32.totalorder %s139, %s142
      %p151 = scmp.eq.s32.totalorder %s26, 1
      %p152 = por %p150, %p151
      %p153 = scmp.ne.s32.totalorder %s142, %s143
      %p154 = scmp.eq.s32.totalorder %s26, 0
      %p155 = por %p153, %p154
      %p156 = scmp.ne.s32.totalorder %s142, %s143
      %p157 = scmp.eq.s32.totalorder %s27, 1
      %p158 = por %p156, %p157
      %p160 = scmp.ne.s32.totalorder %s143, %s159
      %p161 = scmp.eq.s32.totalorder %s27, 0
      %p162 = por %p160, %p161
      %p163 = scmp.le.s32.totalorder 1, %s21
      %p164 = scmp.lt.s32.totalorder %s21, 3
      %p165 = pnand %p163, %p164
      %p166 = pneg %p165
      // Predicated region
      $region9: #{tpu_custom_call.1} parent=5 // pred_check
        _
      $region10: #{tpu_custom_call.1} parent=5 // pred_check_branch
        %168 = sbr.rel (%p165) target = $region12
      $region11: #{tpu_custom_call.1} parent=5 // pred_region
        %s169 = ssub.s32 %s21, 1
        // Predicated region
        $region13: #{tpu_custom_call.1} parent=11 // pred_check
          %p170 = pneg %p80
        $region14: #{tpu_custom_call.1} parent=11 // pred_check_branch
          %172 = sbr.rel (%p170) target = $region16
        $region15: #{tpu_custom_call.1} parent=11 // pred_region
          %174 = vsyncadd [#allocation10], 0
          %s176 = sshll.u32 %s1, 4
          %s177 = int_to_ptr.hbm [resolvable:$true] %s176
          %s178 = sshll.u32 [#allocation9], 4
          %s179 = int_to_ptr.vmem [resolvable:$true] %s178
          %181 = dma.hbm_to_vmem [thread:$0]  %s177, 64, %s179, [#allocation10]
        $region16: #{tpu_custom_call.1} parent=11 // pred_fallthru
          _
        // Predicated region
        $region17: #{tpu_custom_call.1} parent=11 // pred_check
          %p182 = pneg %p101
        $region18: #{tpu_custom_call.1} parent=11 // pred_check_branch
          %184 = sbr.rel (%p182) target = $region20
        $region19: #{tpu_custom_call.1} parent=11 // pred_region
          _
        $region20: #{tpu_custom_call.1} parent=11 // pred_fallthru
          _
      $region12: #{tpu_custom_call.1} parent=5 // pred_fallthru
        _
      %p185 = scmp.lt.s32.totalorder %s21, 2
      // Predicated region
      $region21: #{tpu_custom_call.1} parent=5 // pred_check
        %p186 = pneg %p185
      $region22: #{tpu_custom_call.1} parent=5 // pred_check_branch
        %188 = sbr.rel (%p186) target = $region24
      $region23: #{tpu_custom_call.1} parent=5 // pred_region
        // Predicated region
        $region25: #{tpu_custom_call.1} parent=23 // pred_check
          %p189 = pneg %p53
        $region26: #{tpu_custom_call.1} parent=23 // pred_check_branch
          %191 = sbr.rel (%p189) target = $region28
        $region27: #{tpu_custom_call.1} parent=23 // pred_region
          %s192 = sand.u32 %s43, 1
          %s193 = scalar_lea.sflag [#allocation7], %s192
          %s194 = sand.u32 %s43, 1
          %s195 = smul.addr %s194, 4
          %s196 = scalar_lea.vmem [#allocation6], %s195
          %198 = vsyncadd %s193, 0
          %s199 = smul.addr %s28, 4
          %s200 = scalar_lea.hbm %s0, %s199
          %s202 = sshll.u32 %s200, 4
          %s203 = int_to_ptr.hbm [resolvable:$true] %s202
          %s204 = sshll.u32 %s196, 4
          %s205 = int_to_ptr.vmem [resolvable:$true] %s204
          %207 = dma.hbm_to_vmem [thread:$0]  %s203, 64, %s205, %s193
        $region28: #{tpu_custom_call.1} parent=23 // pred_fallthru
          _
      $region24: #{tpu_custom_call.1} parent=5 // pred_fallthru
        _
      %p208 = scmp.le.s32.totalorder 1, %s21
      %p209 = scmp.lt.s32.totalorder %s21, 3
      %p210 = pnand %p208, %p209
      %p211 = pneg %p210
      // Predicated region
      $region29: #{tpu_custom_call.1} parent=5 // pred_check
        _
      $region30: #{tpu_custom_call.1} parent=5 // pred_check_branch
        %213 = sbr.rel (%p210) target = $region32
      $region31: #{tpu_custom_call.1} parent=5 // pred_region
        %s214 = ssub.s32 %s21, 1
        %s215 = sand.u32 %s46, 1
        %s216 = scalar_lea.sflag [#allocation7], %s215
        %s217 = sand.u32 %s46, 1
        %s218 = smul.addr %s217, 4
        %s219 = scalar_lea.vmem [#allocation6], %s218
        // Predicated region
        $region33: #{tpu_custom_call.1} parent=31 // pred_check
          %p220 = pneg %p59
        $region34: #{tpu_custom_call.1} parent=31 // pred_check_branch
          %222 = sbr.rel (%p220) target = $region36
        $region35: #{tpu_custom_call.1} parent=31 // pred_region
          %224 = dma.done %s216, 64
        $region36: #{tpu_custom_call.1} parent=31 // pred_fallthru
          _
        // Predicated region
        $region37: #{tpu_custom_call.1} parent=31 // pred_check
          %p225 = pneg %p80
        $region38: #{tpu_custom_call.1} parent=31 // pred_check_branch
          %227 = sbr.rel (%p225) target = $region40
        $region39: #{tpu_custom_call.1} parent=31 // pred_region
          %229 = dma.done [#allocation10], 64
        $region40: #{tpu_custom_call.1} parent=31 // pred_fallthru
          _
        %s230 = sand.u32 %s46, 1
        %s231 = scalar_lea.sflag [#allocation7], %s230
        %s232 = sand.u32 %s46, 1
        %s233 = smul.addr %s232, 4
        %s234 = scalar_lea.vmem [#allocation6], %s233
        %p235 = pneg %p59
        %p236 = pneg %p56
        %p237 = pneg %p80
        %p238 = pneg %p77
        %p239 = pneg %p101
        %p240 = pneg %p98
        %p241 = pneg %p127
        %p242 = pneg %p124
        %s243 = sand.u32 %s114, 1
        %s244 = scalar_lea.sflag [#allocation8], %s243
        %s245 = sand.u32 %s114, 1
        %s246 = smul.addr %s245, 4
        %s247 = scalar_lea.vmem [#allocation11], %s246
        %p248 = pneg %p155
        %p249 = pneg %p152
        %s250 = sand.u32 %s142, 1
        %s251 = scalar_lea.sflag [#allocation13], %s250
        %s252 = sand.u32 %s142, 1
        %s253 = smul.addr %s252, 16
        %s254 = scalar_lea.vmem [#allocation12], %s253
        %p255 = scmp.eq.s32.totalorder %s31, 0
        // Predicated region
        $region41: #{tpu_custom_call.1} parent=31 // pred_check
          %p256 = pneg %p255
        $region42: #{tpu_custom_call.1} parent=31 // pred_check_branch
          %258 = sbr.rel (%p256) target = $region44
        $region43: #{tpu_custom_call.1} parent=31 // pred_region
          %v259 = vld [vmem:[%s219] sm:$0xf]
          %v260 = vld [vmem:[#allocation9] sm:$0xf]
          %v261 = vld [vmem:[%s2] sm:$0x1]
          %v263 = vperm.slane %v261, 0
          %265 = vxpose.xlu0.b32.start [1/16] %v259, 128
          %266 = vxpose.xlu0.b32.cont [2/16] 0.0, 128
          %267 = vxpose.xlu0.b32.cont [3/16] 0.0, 128
          %268 = vxpose.xlu0.b32.cont [4/16] 0.0, 128
          %269 = vxpose.xlu0.b32.cont [5/16] 0.0, 128
          %270 = vxpose.xlu0.b32.cont [6/16] 0.0, 128
          %271 = vxpose.xlu0.b32.cont [7/16] 0.0, 128
          %272 = vxpose.xlu0.b32.cont [8/16] 0.0, 128
          %273 = vxpose.xlu0.b32.cont [9/16] 0.0, 128
          %274 = vxpose.xlu0.b32.cont [10/16] 0.0, 128
          %275 = vxpose.xlu0.b32.cont [11/16] 0.0, 128
          %276 = vxpose.xlu0.b32.cont [12/16] 0.0, 128
          %277 = vxpose.xlu0.b32.cont [13/16] 0.0, 128
          %278 = vxpose.xlu0.b32.cont [14/16] 0.0, 128
          %279 = vxpose.xlu0.b32.cont [15/16] 0.0, 128
          %280 = vxpose.xlu0.b32.end [16/16] 0.0, 128
          %v281 = vpop.trf.xlu0
          %v282 = vpop.trf.xlu0
          %v283 = vpop.trf.xlu0
          %v284 = vpop.trf.xlu0
          %v285 = vpop.trf.xlu0
          %v286 = vpop.trf.xlu0
          %v287 = vpop.trf.xlu0
          %v288 = vpop.trf.xlu0
          %v289 = vpop.trf.xlu0
          %v290 = vpop.trf.xlu0
          %v291 = vpop.trf.xlu0
          %v292 = vpop.trf.xlu0
          %v293 = vpop.trf.xlu0
          %v294 = vpop.trf.xlu0
          %v295 = vpop.trf.xlu0
          %v296 = vpop.trf.xlu0
          %vm297 = vcmask 31744
          %v299 = vsel %vm297, %v281, 0
          %v302 = vsel %vm297, %v282, 0
          %vm304 = vcmask 1043456
          %v306 = vsel %vm304, %v260, 0
          %308 = vmatpush.msra.mxu0 0.0
          %309 = vmatpush.msra.mxu0 0.0
          %310 = vmatpush.msra.mxu0 0.0
          %311 = vmatpush.msra.mxu0 0.0
          %312 = vmatpush.msra.mxu0 0.0
          %313 = vmatpush.msra.mxu0 0.0
          %314 = vmatpush.msra.mxu0 0.0
          %315 = vmatpush.msra.mxu0 0.0
          %316 = vmatpush.msra.mxu0 0.0
          %317 = vmatpush.msra.mxu0 0.0
          %318 = vmatpush.msra.mxu0 0.0
          %319 = vmatpush.msra.mxu0 0.0
          %320 = vmatpush.msra.mxu0 0.0
          %321 = vmatpush.msra.mxu0 0.0
          %322 = vmatpush.msra.mxu0 0.0
          %323 = vmatpush.msra.mxu0 %v306
          %324 = vmatmul.f32.gmra.mxu0 %v299
          %v325 = vpop.f32.mrf.mxu0
          %v326 = vadd.f32 %v263, %v325
          %327 = vmatmul.f32.gmra.mxu0 %v302
          %v328 = vpop.f32.mrf.mxu0
          %v329 = vadd.f32 %v263, %v328
          %330 = vdwg.mxu0
          %331 = vst.msk [vmem:[#allocation2] sm:$0xff] %vm297, %v326
          %332 = vst.msk [vmem:[#allocation2 + $0x8] sm:$0xff] %vm297, %v329
          %335 = vrot.lane.b32.xlu0 %v326, 124
          %v336 = vpop.permute.xlu0 %335
          %337 = vrot.lane.b32.xlu0 %v329, 124
          %v338 = vpop.permute.xlu0 %337
          %341 = vst.msk [vmem:[#allocation3] sm:$0xff] %vm297, %v336
          %342 = vst.msk [vmem:[#allocation3 + $0x8] sm:$0xff] %vm297, %v338
          %343 = vrot.lane.b32.xlu0 %v326, 120
          %v344 = vpop.permute.xlu0 %343
          %345 = vrot.lane.b32.xlu0 %v329, 120
          %v346 = vpop.permute.xlu0 %345
          %349 = vst.msk [vmem:[#allocation4] sm:$0xff] %vm297, %v344
          %350 = vst.msk [vmem:[#allocation4 + $0x8] sm:$0xff] %vm297, %v346
          %351 = vst.msk [vmem:[#allocation5] sm:$0xff] %vm297, 0.0
          %352 = vst.msk [vmem:[#allocation5 + $0x8] sm:$0xff] %vm297, 0.0
        $region44: #{tpu_custom_call.1} parent=31 // pred_fallthru
          _
        %s353 = smul.u32 %s31, 16
        %v354 = vld [vmem:[#allocation2] sm:$0xff]
        %v355 = vld [vmem:[#allocation2 + $0x8] sm:$0xff]
        %s356 = scalar_lea.vmem [#allocation3], %s353
        %v357 = vld [vmem:[%s356] sm:$0xff]
        %v358 = vld [vmem:[%s356 + $0x8] sm:$0xff]
        %vm359 = vcmask 31744
        %v361 = vsel %vm359, %v354, 0
        %v364 = vsel %vm359, %v355, 0
        %v367 = vsel %vm359, %v357, 0
        %v370 = vsel %vm359, %v358, 0
        %372 = vmatpush.xpose.msra.mxu0 0.0
        %373 = vmatpush.xpose.msra.mxu0 0.0
        %374 = vmatpush.xpose.msra.mxu0 0.0
        %375 = vmatpush.xpose.msra.mxu0 0.0
        %376 = vmatpush.xpose.msra.mxu0 0.0
        %377 = vmatpush.xpose.msra.mxu0 0.0
        %378 = vmatpush.xpose.msra.mxu0 0.0
        %379 = vmatpush.xpose.msra.mxu0 0.0
        %380 = vmatpush.xpose.msra.mxu0 0.0
        %381 = vmatpush.xpose.msra.mxu0 0.0
        %382 = vmatpush.xpose.msra.mxu0 0.0
        %383 = vmatpush.xpose.msra.mxu0 0.0
        %384 = vmatpush.xpose.msra.mxu0 0.0
        %385 = vmatpush.xpose.msra.mxu0 0.0
        %386 = vmatpush.xpose.msra.mxu0 %v370
        %387 = vmatpush.xpose.msra.mxu0 %v367
        %388 = vmatmul.f32.gmra.mxu0 %v361
        %v389 = vpop.f32.mrf.mxu0
        %v390 = vadd.f32 0.0, %v389
        %391 = vmatmul.f32.gmra.mxu0 %v364
        %v392 = vpop.f32.mrf.mxu0
        %v393 = vadd.f32 0.0, %v392
        %394 = vdwg.mxu0
        %v395 = vlaneseq
        %v396 = vshrl.u32 %v395, 7
        %v397 = vadd.s32 %v396, 8
        %v398 = vlaneseq
        %v399 = vand.u32 %v398, 127
        %v400 = vstv %s353
        %v401 = vadd.s32 %v399, %v400
        %vm402 = vcmp.gt.s32.totalorder %v401, %v396
        %vm403 = vcmp.gt.s32.totalorder %v401, %v397
        %v404 = vsel %vm402, -inf, %v390
        %v405 = vsel %vm403, -inf, %v393
        %vm406 = vcmask 130048
        %v407 = vsel %vm406, %v404, -inf
        %v408 = vsel %vm406, %v405, -inf
        %v409 = vmax.f32 %v407, %v408
        %v410 = vrot.slane %v409, 4
        %v411 = vmax.f32 %v409, %v410
        %v412 = vrot.slane %v411, 2
        %v413 = vmax.f32 %v411, %v412
        %v414 = vrot.slane %v413, 1
        %v415 = vmax.f32 %v413, %v414
        %v416 = vsub.f32 %v404, %v415
        %v417 = vsub.f32 %v405, %v415
        %v418 = vmul.f32 %v416, 1.442695
        %v419 = vpow.pop %v418
        %v420 = vmul.f32 %v417, 1.442695
        %v421 = vpow.pop %v420
        %v422 = vsel %vm406, %v419, 0.0
        %v423 = vsel %vm406, %v421, 0.0
        %v424 = vadd.f32 %v422, %v423
        %v425 = vrot.slane %v424, 4
        %v426 = vadd.f32 %v424, %v425
        %v427 = vrot.slane %v426, 2
        %v428 = vadd.f32 %v426, %v427
        %v429 = vrot.slane %v428, 1
        %v430 = vadd.f32 %v428, %v429
        %v431 = vrcp.pop %v430
        %v432 = vmul.f32 %v430, %v431
        %v433 = vsub.f32 1.0, %v432
        %v434 = vmul.f32 %v431, %v433
        %v435 = vadd.f32 %v431, %v434
        %vm436 = vweird.f32 %v430
        %vm437 = vweird.f32 %v431
        %vm438 = vmor %vm436, %vm437
        %v439 = vsel %vm438, %v431, %v435
        %v440 = vand.u32 2147483647, %v430
        %vm441 = vcmp.eq.f32.partialorder %v440, 8.507059e+37
        %v442 = vand.u32 %v430, 2147483648
        %v443 = vor.u32 1.1754944e-38, %v442
        %v444 = vsel %vm441, %v443, %v439
        %v445 = vmul.f32 %v419, %v444
        %v446 = vmul.f32 %v421, %v444
        %447 = vst.msk [vmem:[%s254] sm:$0xff] %vm406, %v445
        %448 = vst.msk [vmem:[%s254 + $0x8] sm:$0xff] %vm406, %v446
        %s449 = scalar_lea.vmem [#allocation4], %s353
        %v450 = vld [vmem:[%s449] sm:$0xff]
        %v451 = vld [vmem:[%s449 + $0x8] sm:$0xff]
        %v452 = vld [vmem:[#allocation5] sm:$0xff]
        %v453 = vld [vmem:[#allocation5 + $0x8] sm:$0xff]
        %v455 = vsel %vm406, %v445, 0
        %v458 = vsel %vm406, %v446, 0
        %460 = vmatpush.msra.mxu0 0.0
        %461 = vmatpush.msra.mxu0 0.0
        %462 = vmatpush.msra.mxu0 0.0
        %463 = vmatpush.msra.mxu0 0.0
        %464 = vmatpush.msra.mxu0 0.0
        %465 = vmatpush.msra.mxu0 0.0
        %466 = vmatpush.msra.mxu0 0.0
        %467 = vmatpush.msra.mxu0 0.0
        %468 = vmatpush.msra.mxu0 0.0
        %469 = vmatpush.msra.mxu0 0.0
        %470 = vmatpush.msra.mxu0 0.0
        %471 = vmatpush.msra.mxu0 0.0
        %472 = vmatpush.msra.mxu0 0.0
        %473 = vmatpush.msra.mxu0 0.0
        %474 = vmatpush.msra.mxu0 %v451
        %475 = vmatpush.msra.mxu0 %v450
        %476 = vmatmul.f32.gmra.mxu0 %v455
        %v477 = vpop.f32.mrf.mxu0
        %v478 = vadd.f32 0.0, %v477
        %479 = vmatmul.f32.gmra.mxu0 %v458
        %v480 = vpop.f32.mrf.mxu0
        %v481 = vadd.f32 0.0, %v480
        %482 = vdwg.mxu0
        %v483 = vadd.f32 %v452, %v478
        %v484 = vadd.f32 %v453, %v481
        %485 = vst.msk [vmem:[#allocation5] sm:$0xff] %vm359, %v483
        %486 = vst.msk [vmem:[#allocation5 + $0x8] sm:$0xff] %vm359, %v484
        // Predicated region
        $region45: #{tpu_custom_call.1} parent=31 // pred_check
          %p487 = pneg %p255
        $region46: #{tpu_custom_call.1} parent=31 // pred_check_branch
          %489 = sbr.rel (%p487) target = $region48
        $region47: #{tpu_custom_call.1} parent=31 // pred_region
          %v490 = vld [vmem:[#allocation5] sm:$0xff]
          %v491 = vld [vmem:[#allocation5 + $0x8] sm:$0xff]
          %492 = vxpose.xlu0.b32.start [1/16] %v490, 128
          %493 = vxpose.xlu0.b32.cont [2/16] %v491, 128
          %494 = vxpose.xlu0.b32.cont [3/16] 0.0, 128
          %495 = vxpose.xlu0.b32.cont [4/16] 0.0, 128
          %496 = vxpose.xlu0.b32.cont [5/16] 0.0, 128
          %497 = vxpose.xlu0.b32.cont [6/16] 0.0, 128
          %498 = vxpose.xlu0.b32.cont [7/16] 0.0, 128
          %499 = vxpose.xlu0.b32.cont [8/16] 0.0, 128
          %500 = vxpose.xlu0.b32.cont [9/16] 0.0, 128
          %501 = vxpose.xlu0.b32.cont [10/16] 0.0, 128
          %502 = vxpose.xlu0.b32.cont [11/16] 0.0, 128
          %503 = vxpose.xlu0.b32.cont [12/16] 0.0, 128
          %504 = vxpose.xlu0.b32.cont [13/16] 0.0, 128
          %505 = vxpose.xlu0.b32.cont [14/16] 0.0, 128
          %506 = vxpose.xlu0.b32.cont [15/16] 0.0, 128
          %507 = vxpose.xlu0.b32.end [16/16] 0.0, 128
          %v508 = vpop.trf.xlu0
          %v509 = vpop.trf.xlu0
          %v510 = vpop.trf.xlu0
          %v511 = vpop.trf.xlu0
          %v512 = vpop.trf.xlu0
          %v513 = vpop.trf.xlu0
          %v514 = vpop.trf.xlu0
          %v515 = vpop.trf.xlu0
          %v516 = vpop.trf.xlu0
          %v517 = vpop.trf.xlu0
          %v518 = vpop.trf.xlu0
          %v519 = vpop.trf.xlu0
          %v520 = vpop.trf.xlu0
          %v521 = vpop.trf.xlu0
          %v522 = vpop.trf.xlu0
          %v523 = vpop.trf.xlu0
          %vm524 = vcmask 125952
          %525 = vst.msk [vmem:[%s247] sm:$0xf] %vm524, %v508
        $region48: #{tpu_custom_call.1} parent=31 // pred_fallthru
          _
        %s526 = sand.u32 %s114, 1
        %s527 = scalar_lea.sflag [#allocation8], %s526
        %s528 = sand.u32 %s114, 1
        %s529 = smul.addr %s528, 4
        %s530 = scalar_lea.vmem [#allocation11], %s529
        %s531 = sand.u32 %s142, 1
        %s532 = scalar_lea.sflag [#allocation13], %s531
        %s533 = sand.u32 %s142, 1
        %s534 = smul.addr %s533, 16
        %s535 = scalar_lea.vmem [#allocation12], %s534
        // Predicated region
        $region49: #{tpu_custom_call.1} parent=31 // pred_check
          %p536 = pneg %p124
        $region50: #{tpu_custom_call.1} parent=31 // pred_check_branch
          %538 = sbr.rel (%p536) target = $region52
        $region51: #{tpu_custom_call.1} parent=31 // pred_region
          %540 = vsyncadd %s527, 0
          %s541 = smul.addr %s30, 4
          %s542 = scalar_lea.hbm %s3, %s541
          %s544 = sshll.u32 %s530, 4
          %s545 = int_to_ptr.vmem [resolvable:$true] %s544
          %s546 = sshll.u32 %s542, 4
          %s547 = int_to_ptr.hbm [resolvable:$true] %s546
          %549 = dma.vmem_to_hbm [thread:$0]  %s545, 64, %s547, %s527
        $region52: #{tpu_custom_call.1} parent=31 // pred_fallthru
          _
        // Predicated region
        $region53: #{tpu_custom_call.1} parent=31 // pred_check
          %p550 = pneg %p152
        $region54: #{tpu_custom_call.1} parent=31 // pred_check_branch
          %552 = sbr.rel (%p550) target = $region56
        $region55: #{tpu_custom_call.1} parent=31 // pred_region
          %554 = vsyncadd %s532, 0
          %s555 = smul.addr %s30, 2
          %s556 = sadd.s32 %s31, %s555
          %s557 = smul.addr %s556, 8
          %s558 = scalar_lea.hbm %s4, %s557
          %s559 = sshll.u32 %s535, 4
          %s560 = int_to_ptr.vmem [resolvable:$true] %s559
          %s561 = sshll.u32 %s558, 4
          %s562 = int_to_ptr.hbm [resolvable:$true] %s561
          %567 = dma.vmem_to_hbm [thread:$0]  %s560, 256, %s562, %s532, 128, 128, 8
        $region56: #{tpu_custom_call.1} parent=31 // pred_fallthru
          _
      $region32: #{tpu_custom_call.1} parent=5 // pred_fallthru
        _
      %p568 = scmp.le.s32.totalorder 2, %s21
      // Predicated region
      $region57: #{tpu_custom_call.1} parent=5 // pred_check
        %p569 = pneg %p568
      $region58: #{tpu_custom_call.1} parent=5 // pred_check_branch
        %571 = sbr.rel (%p569) target = $region60
      $region59: #{tpu_custom_call.1} parent=5 // pred_region
        %s572 = ssub.s32 %s21, 2
        // Predicated region
        $region61: #{tpu_custom_call.1} parent=59 // pred_check
          %p573 = pneg %p130
        $region62: #{tpu_custom_call.1} parent=59 // pred_check_branch
          %575 = sbr.rel (%p573) target = $region64
        $region63: #{tpu_custom_call.1} parent=59 // pred_region
          %s576 = sand.u32 %s115, 1
          %s577 = scalar_lea.sflag [#allocation8], %s576
          %s578 = sand.u32 %s115, 1
          %s579 = smul.addr %s578, 4
          %s580 = scalar_lea.vmem [#allocation11], %s579
          %582 = dma.done %s577, 64
        $region64: #{tpu_custom_call.1} parent=59 // pred_fallthru
          _
        // Predicated region
        $region65: #{tpu_custom_call.1} parent=59 // pred_check
          %p583 = pneg %p158
        $region66: #{tpu_custom_call.1} parent=59 // pred_check_branch
          %585 = sbr.rel (%p583) target = $region68
        $region67: #{tpu_custom_call.1} parent=59 // pred_region
          %s586 = sand.u32 %s143, 1
          %s587 = scalar_lea.sflag [#allocation13], %s586
          %s588 = sand.u32 %s143, 1
          %s589 = smul.addr %s588, 16
          %s590 = scalar_lea.vmem [#allocation12], %s589
          %592 = dma.done %s587, 256
        $region68: #{tpu_custom_call.1} parent=59 // pred_fallthru
          _
      $region60: #{tpu_custom_call.1} parent=5 // pred_fallthru
        _
    $region6: #{tpu_custom_call.1} parent=1 // loop_footer
      %s25 = sadd.s32 1, %s21
    $region7: #{tpu_custom_call.1} parent=1 // loop_footer_branch
      %20 = sbr.rel target = $region3
    $region8: #{tpu_custom_call.1} parent=1 // loop_exit
      _
    %593 = vsyncpa [#allocation7], 1
    %s594 = scalar_lea.sflag [#allocation7], 1
    %595 = vsyncpa %s594, 1
    %596 = vsyncpa [#allocation10], 1
    %597 = vsyncpa [#allocation8], 1
    %s598 = scalar_lea.sflag [#allocation8], 1
    %599 = vsyncpa %s598, 1
    %600 = vsyncpa [#allocation13], 1
    %s601 = scalar_lea.sflag [#allocation13], 1
    %602 = vsyncpa %s601, 1

</llo_original>
